<compile_context>
chip_gen: v7x
topology: tpu7x:2x2x1
jax: 0.10.0
libtpu: 0.0.40
codegen_flags: <defaults>
</compile_context>

<pallas_src>
import math

import jax
import jax.numpy as jnp
from jax.experimental import pallas as pl
from jax.experimental.pallas import tpu as pltpu

_LANE = 128
_SUBLANE = 8
_TILE_BYTES = 1 * 1024 * 1024  # 1 MiB/tile: mem-bound copy is at roofline by here


def _copy_kernel(x_ref, o_ref):
    # Identity copy of the current lane-dense block; the "view" itself is a
    # free metadata reshape done in the wrapper.
    o_ref[...] = x_ref[...]


def _pallas_copy_flat(flat: jax.Array) -> jax.Array:
    """Identity copy of a 1-D array through a lane-dense, tiled Pallas kernel."""
    n = flat.shape[0]
    itemsize = jnp.dtype(flat.dtype).itemsize

    # Pad to a multiple of 8*128 so the slab is always (rows, 128) with
    # rows % 8 == 0: full unmasked vregs, never a lane-hostile (1, n) block.
    chunk = _SUBLANE * _LANE  # 1024 elements
    n_pad = ((n + chunk - 1) // chunk) * chunk
    if n_pad != n:
        flat = jnp.pad(flat, (0, n_pad - n))
    rows = n_pad // _LANE
    x2 = jnp.reshape(flat, (rows, _LANE))

    # Row tile: largest multiple of 8 rows that fits in _TILE_BYTES, capped
    # at the full extent.  cdiv grid tolerates a partial last tile.
    cap_rows = max(_SUBLANE,
                   (_TILE_BYTES // (_LANE * itemsize)) // _SUBLANE * _SUBLANE)
    tile_rows = min(rows, cap_rows)
    grid = (pl.cdiv(rows, tile_rows),)

    out2 = pl.pallas_call(
        _copy_kernel,
        out_shape=jax.ShapeDtypeStruct((rows, _LANE), flat.dtype),
        grid=grid,
        in_specs=[pl.BlockSpec((tile_rows, _LANE), lambda i: (i, 0))],
        out_specs=pl.BlockSpec((tile_rows, _LANE), lambda i: (i, 0)),
        cost_estimate=pl.CostEstimate(
            flops=0, transcendentals=0,
            bytes_accessed=2 * rows * _LANE * itemsize),
        compiler_params=pltpu.CompilerParams(
            dimension_semantics=("parallel",),  # shard tiles across v7x's 2 TCs
        ),
    )(x2)

    out_flat = jnp.reshape(out2, (n_pad,))
    if n_pad != n:
        out_flat = out_flat[:n]
    return out_flat


def flatten(x: jax.Array, materialize: bool = False) -> jax.Array:
    """Pallas/JAX equivalent of `input.view(input.size(0), 1)`.

    Default: pure metadata reshape (free; no kernel, no HBM traffic).
    materialize=True: route the bytes through the tiled Pallas copy kernel
    (useful only when an explicit HBM materialization boundary is wanted).
    """
    n = x.shape[0]
    total = math.prod(x.shape)
    if total != n:
        raise ValueError(
            f"Flatten.view(N, 1) requires exactly N elements, got shape {x.shape}"
        )

    if not materialize:
        return jnp.reshape(x, (n, 1))

    flat = jnp.reshape(x, (n,))
    return jnp.reshape(_pallas_copy_flat(flat), (n, 1))


if __name__ == "__main__":
    key = jax.random.PRNGKey(0)

    # Shape implied by the module: (N, 1, 1, 1) with small N.
    x = jax.random.normal(key, (2, 1, 1, 1), dtype=jnp.float32)
    ref = x.reshape(x.shape[0], 1)

    # Default path: pure metadata view (no kernel).
    out_view = jax.block_until_ready(flatten(x))
    assert out_view.shape == (2, 1), out_view.shape
    assert out_view.dtype == x.dtype
    assert bool(jnp.all(out_view == ref))

    # Pallas path: run the copy kernel once (ragged N=2 -> padded (8,128) slab).
    out_mat = jax.block_until_ready(flatten(x, materialize=True))
    assert out_mat.shape == (2, 1), out_mat.shape
    assert out_mat.dtype == x.dtype
    assert bool(jnp.all(out_mat == ref))

    # Lane-dense / larger case through the Pallas path as well.
    x_b = jax.random.normal(jax.random.PRNGKey(1), (256, 1, 1, 1),
                            dtype=jnp.float32)
    ref_b = x_b.reshape(x_b.shape[0], 1)
    out_b = jax.block_until_ready(flatten(x_b, materialize=True))
    assert out_b.shape == (256, 1), out_b.shape
    assert bool(jnp.all(out_b == ref_b))

    print("KERNEL_OK")
</pallas_src>

<mosaic_0001>
module attributes {stable_mosaic.version = 11 : i64} {
  func.func @_copy_kernel(%arg0: i32, %arg1: memref<8x128xf32, #tpu.memory_space<vmem>>, %arg2: memref<8x128xf32, #tpu.memory_space<vmem>>) attributes {dimension_semantics = [#tpu.dimension_semantics<parallel>], iteration_bounds = array<i64: 1>, scalar_prefetch = 0 : i64, scratch_operands = 0 : i64, tpu.core_type = #tpu.core_type<tc>, window_params = [{transform_indices = @transform_0, window_bounds = array<i64: 8, 128>}, {transform_indices = @transform_1, window_bounds = array<i64: 8, 128>}]} {
    %c0 = arith.constant 0 : index
    %c0_0 = arith.constant 0 : index
    %0 = vector.load %arg1[%c0, %c0_0] : memref<8x128xf32, #tpu.memory_space<vmem>>, vector<8x128xf32>
    %c0_1 = arith.constant 0 : index
    %c0_2 = arith.constant 0 : index
    %1 = vector.load %arg2[%c0_1, %c0_2] : memref<8x128xf32, #tpu.memory_space<vmem>>, vector<8x128xf32>
    tpu.vector_store %arg2[%c0_1, %c0_2], %0 {strides = array<i32>} : memref<8x128xf32, #tpu.memory_space<vmem>>, vector<8x128xf32>,
    return
  }
  func.func @transform_0(%arg0: i32) -> (i32, i32) {
    %c0_i32 = arith.constant 0 : i32
    %c0_i32_0 = arith.constant 0 : i32
    return %arg0, %c0_i32 : i32, i32
  }
  func.func @transform_1(%arg0: i32) -> (i32, i32) {
    %c0_i32 = arith.constant 0 : i32
    %c0_i32_0 = arith.constant 0 : i32
    return %arg0, %c0_i32 : i32, i32
  }
}

</mosaic_0001>

<llo_original>
// kernel: tpu_custom_call.1
$region0: #{tpu_custom_call.1}
  #allocation0 [shape = 'u32[]', space=smem, size = 0x4, offset = 0x4, fixed_abs, tag = 'smem constant byte address 0x4 - core index']
  #allocation1 [shape = 'u32[144,128]{1,0:T(1,128)}', space=vmem, size = 0x12000, scoped, tag = 'internal scratch']
  %s0 = inlined_call_operand.hbm [shape: f32[8,128], index: 0, kind: input, shape index: {}]
  %s1 = inlined_call_operand.hbm [shape: f32[8,128], index: 1, kind: output, shape index: {}]
  %s2 = sld [smem:[#allocation0]]
  $region18: #{tpu_custom_call.1} parent=0
    _
  %s4 = ssub.s32 1, %s2
  %s5 = scalar_select 0, %s4, %s2
  $region1: #{tpu_custom_call.1} parent=0
    #allocation2 [shape = 'u8[4096]{0}', space=vmem, size = 0x1000, scoped, tag = 'input window, operand 0, single buffered']
    #allocation3 [shape = 's32[1]{0}', space=sflag, size = 0x4, scoped, tag = 'scoped memory for tpu_custom_call.1']
    #allocation4 [shape = 's32[1]{0}', space=sflag, size = 0x4, scoped, tag = 'scoped memory for tpu_custom_call.1']
    #allocation5 [shape = 'u8[4096]{0}', space=vmem, size = 0x1000, scoped, tag = 'output window, operand 0, single buffered']
    %6 = vsyncpa [#allocation3], 0
    %7 = vsyncpa [#allocation4], 0
    // Predicated region
    $region2: #{tpu_custom_call.1} parent=1 // pred_check
      _
    $region3: #{tpu_custom_call.1} parent=1 // pred_check_branch
      %9 = sbr.rel (0) target = $region5
    $region4: #{tpu_custom_call.1} parent=1 // pred_region
      %s11 = ssub.s32 128, 128
      %12 = vsyncadd [#allocation3], %s11
      %s14 = sshll.u32 [#allocation2], 4
      %s15 = int_to_ptr.vmem [resolvable:$true] %s14
      %17 = dma.hbm_to_vmem [thread:$0]  %s0, 128, %s15, [#allocation3]
    $region5: #{tpu_custom_call.1} parent=1 // pred_fallthru
      _
    // Predicated region
    $region6: #{tpu_custom_call.1} parent=1 // pred_check
      _
    $region7: #{tpu_custom_call.1} parent=1 // pred_check_branch
      %19 = sbr.rel (0) target = $region9
    $region8: #{tpu_custom_call.1} parent=1 // pred_region
      %20 = dma.done [#allocation3], 128
    $region9: #{tpu_custom_call.1} parent=1 // pred_fallthru
      _
    %v21 = vld [vmem:[#allocation2] sm:$0xff]
    %22 = vst [vmem:[#allocation5] sm:$0xff] %v21
    // Predicated region
    $region10: #{tpu_custom_call.1} parent=1 // pred_check
      _
    $region11: #{tpu_custom_call.1} parent=1 // pred_check_branch
      %24 = sbr.rel (0) target = $region13
    $region12: #{tpu_custom_call.1} parent=1 // pred_region
      %s26 = ssub.s32 128, 128
      %27 = vsyncadd [#allocation4], %s26
      %s29 = sshll.u32 [#allocation5], 4
      %s30 = int_to_ptr.vmem [resolvable:$true] %s29
      %32 = dma.vmem_to_hbm [thread:$0]  %s30, 128, %s1, [#allocation4]
    $region13: #{tpu_custom_call.1} parent=1 // pred_fallthru
      _
    // Predicated region
    $region14: #{tpu_custom_call.1} parent=1 // pred_check
      _
    $region15: #{tpu_custom_call.1} parent=1 // pred_check_branch
      %34 = sbr.rel (0) target = $region17
    $region16: #{tpu_custom_call.1} parent=1 // pred_region
      %35 = dma.done [#allocation4], 128
    $region17: #{tpu_custom_call.1} parent=1 // pred_fallthru
      _
    %36 = vsyncpa [#allocation3], 1
    %37 = vsyncpa [#allocation4], 1

</llo_original>
